<compile_context>
chip_gen: v6e
topology: v6e:2x2x1
jax: 0.10.0
libtpu: 0.0.40
codegen_flags: <defaults>
</compile_context>

<pallas_src>
import jax
import jax.numpy as jnp
from jax.experimental import pallas as pl
from jax.experimental.pallas import tpu as pltpu


def attn_agg_kernel(x_ref, w1_ref, b1_ref, w2t_ref, b2_ref, o_ref):
    # x_ref: (1, N, D) VMEM ; w1_ref: (D, H) ; b1_ref: (1, H) ; w2t_ref: (1, H)
    # b2_ref: (1,) SMEM scalar ; o_ref: (1, 1, D)
    x = x_ref[0]                                                      # (N, D) f32

    # Linear(D->H) on the MXU, + bias, tanh on the EUP.
    h = jnp.tanh(
        jnp.dot(x, w1_ref[...], preferred_element_type=jnp.float32)
        + b1_ref[...]                                                 # (1, H) broadcast
    )                                                                 # (N, H)

    # Linear(H->1) as VPU multiply + lane reduce (w2 pre-transposed to (1, H)).
    scores = jnp.sum(h * w2t_ref[...], axis=-1, keepdims=True) + b2_ref[0]   # (N, 1)

    # Softmax over the sequence axis (dim 0), max-stabilized.
    m = jnp.max(scores, axis=0, keepdims=True)                        # (1, 1)
    e = jnp.exp(scores - m)                                           # (N, 1)
    w = e * pl.reciprocal(jnp.sum(e, axis=0, keepdims=True), approx=True)    # (N, 1)

    # Weighted sum on the MXU: contract over N -> (1, D).
    o_ref[0] = jax.lax.dot_general(
        w, x,
        dimension_numbers=(((0,), (0,)), ((), ())),
        preferred_element_type=jnp.float32,
    )                                                                 # (1, D)


def attention_aggregator_batched(x, w1, b1, w2, b2):
    """x: (B, N, D) f32; returns (B, D) f32 — B independent AttentionAggregator.forward calls."""
    B, N, D = x.shape
    H = w1.shape[1]

    b1_2d = b1.reshape(1, H).astype(jnp.float32)     # (1, H)
    w2_t = w2.reshape(1, H).astype(jnp.float32)      # (H, 1) -> (1, H)
    b2_s = b2.reshape(1).astype(jnp.float32)         # (1,) scalar -> SMEM

    out = pl.pallas_call(
        attn_agg_kernel,
        out_shape=jax.ShapeDtypeStruct((B, 1, D), jnp.float32),
        grid=(B,),
        in_specs=[
            pl.BlockSpec((1, N, D), lambda b: (b, 0, 0)),                 # per-sequence tile
            pl.BlockSpec((D, H), lambda b: (0, 0)),                       # W1 resident
            pl.BlockSpec((1, H), lambda b: (0, 0)),                       # b1 resident
            pl.BlockSpec((1, H), lambda b: (0, 0)),                       # w2^T resident
            pl.BlockSpec(memory_space=pltpu.MemorySpace.SMEM),            # b2 scalar
        ],
        out_specs=pl.BlockSpec((1, 1, D), lambda b: (b, 0, 0)),
        compiler_params=pltpu.CompilerParams(
            dimension_semantics=("parallel",),   # batch axis -> both TCs on v7x
        ),
    )(x, w1, b1_2d, w2_t, b2_s)
    return out[:, 0, :]


def attention_aggregator(x, w1, b1, w2, b2):
    """x: (N, D) f32; returns (D,) f32 — exact AttentionAggregator.forward semantics."""
    return attention_aggregator_batched(x[None], w1, b1, w2, b2)[0]


def reference(x, w1, b1, w2, b2):
    scores = (jnp.tanh(x @ w1 + b1) @ w2 + b2)[:, 0]        # (N,)
    weights = jax.nn.softmax(scores, axis=0)                 # (N,)
    return jnp.sum(x * weights[:, None], axis=0)             # (D,)


if __name__ == "__main__":
    # Small shapes consistent with the module: batch of B=4 sequences,
    # seq N=8, feature_dim D=128, hidden_dim H=128 (module default), lane-dense.
    B, N, D, H = 4, 8, 128, 128

    key = jax.random.PRNGKey(0)
    kx, k1, k2, k3, k4 = jax.random.split(key, 5)

    x = jax.random.normal(kx, (B, N, D), dtype=jnp.float32)

    # Deterministic parameter init (uniform, PyTorch-Linear-like bound 1/sqrt(fan_in))
    bound1 = 1.0 / (D ** 0.5)
    bound2 = 1.0 / (H ** 0.5)
    w1 = jax.random.uniform(k1, (D, H), jnp.float32, -bound1, bound1)
    b1 = jax.random.uniform(k2, (H,), jnp.float32, -bound1, bound1)
    w2 = jax.random.uniform(k3, (H, 1), jnp.float32, -bound2, bound2)
    b2 = jax.random.uniform(k4, (1,), jnp.float32, -bound2, bound2)

    # Batched kernel (one pallas_call for all B sequences).
    out = attention_aggregator_batched(x, w1, b1, w2, b2)
    out = jax.block_until_ready(out)

    ref = jax.vmap(lambda xb: reference(xb, w1, b1, w2, b2))(x)
    assert out.shape == (B, D)
    # Tolerance relaxed slightly for the approx (EUP) reciprocal in the softmax.
    assert jnp.allclose(out, ref, atol=2e-3, rtol=2e-3), (out, ref)

    # Single-sequence entry point matching the PyTorch forward exactly.
    out1 = jax.block_until_ready(attention_aggregator(x[0], w1, b1, w2, b2))
    assert out1.shape == (D,)
    assert jnp.allclose(out1, ref[0], atol=2e-3, rtol=2e-3), (out1, ref[0])

    print("KERNEL_OK")
</pallas_src>

<mosaic_0001>
module attributes {stable_mosaic.version = 11 : i64} {
  func.func @attn_agg_kernel(%arg0: i32, %arg1: memref<1x8x128xf32, #tpu.memory_space<vmem>>, %arg2: memref<128x128xf32, #tpu.memory_space<vmem>>, %arg3: memref<1x128xf32, #tpu.memory_space<vmem>>, %arg4: memref<1x128xf32, #tpu.memory_space<vmem>>, %arg5: memref<1xf32, #tpu.memory_space<smem>>, %arg6: memref<1x1x128xf32, #tpu.memory_space<vmem>>) attributes {dimension_semantics = [#tpu.dimension_semantics<parallel>], iteration_bounds = array<i64: 4>, scalar_prefetch = 0 : i64, scratch_operands = 0 : i64, tpu.core_type = #tpu.core_type<tc>, window_params = [{transform_indices = @transform_0, window_bounds = array<i64: 1, 8, 128>}, {pipeline_mode = #tpu.pipeline_mode<synchronous>, transform_indices = @transform_1, window_bounds = array<i64: 128, 128>}, {pipeline_mode = #tpu.pipeline_mode<synchronous>, transform_indices = @transform_2, window_bounds = array<i64: 1, 128>}, {pipeline_mode = #tpu.pipeline_mode<synchronous>, transform_indices = @transform_3, window_bounds = array<i64: 1, 128>}, {transform_indices = @transform_4, window_bounds = array<i64: 1>}, {transform_indices = @transform_5, window_bounds = array<i64: 1, 1, 128>}]} {
    %c0 = arith.constant 0 : index
    %c0_0 = arith.constant 0 : index
    %c0_1 = arith.constant 0 : index
    %0 = vector.load %arg1[%c0, %c0_0, %c0_1] : memref<1x8x128xf32, #tpu.memory_space<vmem>>, vector<1x8x128xf32>
    %1 = vector.shape_cast %0 : vector<1x8x128xf32> to vector<8x128xf32>
    %c0_2 = arith.constant 0 : index
    %c0_3 = arith.constant 0 : index
    %2 = vector.load %arg2[%c0_2, %c0_3] : memref<128x128xf32, #tpu.memory_space<vmem>>, vector<128x128xf32>
    %cst = arith.constant dense<0.000000e+00> : vector<8x128xf32>
    %3 = tpu.matmul %1, %2, %cst {dimension_numbers = #tpu.dot_dimension_numbers<[1], [0], [0], [1], [0, 0, 1, 1], [], []>} : vector<8x128xf32>, vector<128x128xf32>, vector<8x128xf32> -> vector<8x128xf32>
    %c0_4 = arith.constant 0 : index
    %c0_5 = arith.constant 0 : index
    %4 = vector.load %arg3[%c0_4, %c0_5] : memref<1x128xf32, #tpu.memory_space<vmem>>, vector<1x128xf32>
    %5 = vector.broadcast %4 : vector<1x128xf32> to vector<8x128xf32>
    %6 = arith.addf %3, %5 : vector<8x128xf32>
    %7 = math.tanh %6 : vector<8x128xf32>
    %c0_6 = arith.constant 0 : index
    %c0_7 = arith.constant 0 : index
    %8 = vector.load %arg4[%c0_6, %c0_7] : memref<1x128xf32, #tpu.memory_space<vmem>>, vector<1x128xf32>
    %9 = vector.broadcast %8 : vector<1x128xf32> to vector<8x128xf32>
    %10 = arith.mulf %7, %9 : vector<8x128xf32>
    %cst_8 = arith.constant dense<0.000000e+00> : vector<8xf32>
    %11 = vector.multi_reduction <add>, %10, %cst_8 [1] : vector<8x128xf32> to vector<8xf32>
    %12 = vector.shape_cast %11 : vector<8xf32> to vector<8x1xf32>
    %c0_9 = arith.constant 0 : index
    %13 = memref.load %arg5[%c0_9] : memref<1xf32, #tpu.memory_space<smem>>
    %14 = vector.broadcast %13 : f32 to vector<8x1xf32>
    %15 = arith.addf %12, %14 : vector<8x1xf32>
    %cst_10 = arith.constant dense<0xFF800000> : vector<1xf32>
    %16 = vector.multi_reduction <maximumf>, %15, %cst_10 [0] : vector<8x1xf32> to vector<1xf32>
    %17 = vector.shape_cast %16 : vector<1xf32> to vector<1x1xf32>
    %18 = vector.broadcast %17 : vector<1x1xf32> to vector<8x1xf32>
    %19 = arith.subf %15, %18 : vector<8x1xf32>
    %20 = math.exp %19 : vector<8x1xf32>
    %cst_11 = arith.constant dense<0.000000e+00> : vector<1xf32>
    %21 = vector.multi_reduction <add>, %20, %cst_11 [0] : vector<8x1xf32> to vector<1xf32>
    %22 = vector.shape_cast %21 : vector<1xf32> to vector<1x1xf32>
    %23 = tpu.reciprocal %22 {approx = true} : vector<1x1xf32> -> vector<1x1xf32>
    %24 = vector.broadcast %23 : vector<1x1xf32> to vector<8x1xf32>
    %25 = arith.mulf %20, %24 : vector<8x1xf32>
    %cst_12 = arith.constant dense<0.000000e+00> : vector<1x128xf32>
    %26 = tpu.matmul %25, %1, %cst_12 {dimension_numbers = #tpu.dot_dimension_numbers<[0], [0], [1], [1], [0, 1, 1, 1], [], []>} : vector<8x1xf32>, vector<8x128xf32>, vector<1x128xf32> -> vector<1x128xf32>
    %c0_13 = arith.constant 0 : index
    %c0_14 = arith.constant 0 : index
    %c0_15 = arith.constant 0 : index
    %27 = vector.load %arg6[%c0_13, %c0_14, %c0_15] : memref<1x1x128xf32, #tpu.memory_space<vmem>>, vector<1x1x128xf32>
    %28 = vector.shape_cast %27 : vector<1x1x128xf32> to vector<1x128xf32>
    %29 = vector.shape_cast %26 : vector<1x128xf32> to vector<1x1x128xf32>
    tpu.vector_store %arg6[%c0_13, %c0_14, %c0_15], %29 {strides = array<i32>} : memref<1x1x128xf32, #tpu.memory_space<vmem>>, vector<1x1x128xf32>,
    return
  }
  func.func @transform_0(%arg0: i32) -> (i32, i32, i32) {
    %c0_i32 = arith.constant 0 : i32
    %c0_i32_0 = arith.constant 0 : i32
    %c0_i32_1 = arith.constant 0 : i32
    return %arg0, %c0_i32, %c0_i32_0 : i32, i32, i32
  }
  func.func @transform_1(%arg0: i32) -> (i32, i32) {
    %c0_i32 = arith.constant 0 : i32
    %c0_i32_0 = arith.constant 0 : i32
    %c0_i32_1 = arith.constant 0 : i32
    return %c0_i32, %c0_i32_0 : i32, i32
  }
  func.func @transform_2(%arg0: i32) -> (i32, i32) {
    %c0_i32 = arith.constant 0 : i32
    %c0_i32_0 = arith.constant 0 : i32
    %c0_i32_1 = arith.constant 0 : i32
    return %c0_i32, %c0_i32_0 : i32, i32
  }
  func.func @transform_3(%arg0: i32) -> (i32, i32) {
    %c0_i32 = arith.constant 0 : i32
    %c0_i32_0 = arith.constant 0 : i32
    %c0_i32_1 = arith.constant 0 : i32
    return %c0_i32, %c0_i32_0 : i32, i32
  }
  func.func @transform_4(%arg0: i32) -> i32 {
    %c0_i32 = arith.constant 0 : i32
    %c0_i32_0 = arith.constant 0 : i32
    return %c0_i32 : i32
  }
  func.func @transform_5(%arg0: i32) -> (i32, i32, i32) {
    %c0_i32 = arith.constant 0 : i32
    %c0_i32_0 = arith.constant 0 : i32
    %c0_i32_1 = arith.constant 0 : i32
    return %arg0, %c0_i32, %c0_i32_0 : i32, i32, i32
  }
}

</mosaic_0001>

<llo_original>
// kernel: tpu_custom_call.1
$region0: #{tpu_custom_call.1}
  #allocation0 [shape = 'u32[]', space=smem, size = 0x4, offset = 0x4, fixed_abs, tag = 'smem constant byte address 0x4 - core index']
  #allocation1 [shape = 'u32[144,128]{1,0:T(1,128)}', space=vmem, size = 0x12000, scoped, tag = 'internal scratch']
  #allocation2 [shape = 'f32[1]{0:T(128)S(6)}', space=smem, size = 0x200, scoped, tag = 'scoped memory for tpu_custom_call.1']
  %s0 = inlined_call_operand.hbm [shape: f32[4,8,128], index: 0, kind: input, shape index: {}]
  %s1 = inlined_call_operand.hbm [shape: f32[128,128], index: 1, kind: input, shape index: {}]
  %s2 = inlined_call_operand.vmem [shape: f32[1,128], index: 2, kind: input, shape index: {}]
  %s3 = inlined_call_operand.vmem [shape: f32[1,128], index: 3, kind: input, shape index: {}]
  %s4 = inlined_call_operand.<no memory space> [shape: f32[1], index: 4, kind: input, shape index: {}]
  %s5 = inlined_call_operand.hbm [shape: f32[4,1,128], index: 5, kind: output, shape index: {}]
  %s6 = sld [smem:[#allocation0]]
  $region61: #{tpu_custom_call.1} parent=0
    _
  %s8 = ssub.s32 1, %s6
  %s9 = scalar_select 0, %s8, %s6
  %10 = sst [smem:[#allocation2]] %s4
  $region1: #{tpu_custom_call.1} parent=0
    #allocation3 [shape = 'u8[8192]{0}', space=vmem, size = 0x2000, scoped, tag = 'input window, operand 0']
    #allocation4 [shape = 's32[2]{0}', space=sflag, size = 0x8, scoped, tag = 'scoped memory for tpu_custom_call.1']
    #allocation5 [shape = 's32[2]{0}', space=sflag, size = 0x8, scoped, tag = 'scoped memory for tpu_custom_call.1']
    #allocation6 [shape = 'u8[65536]{0}', space=vmem, size = 0x10000, scoped, tag = 'input window, operand 1, single buffered']
    #allocation7 [shape = 's32[1]{0}', space=sflag, size = 0x4, scoped, tag = 'scoped memory for tpu_custom_call.1']
    #allocation8 [shape = 'u8[1024]{0}', space=vmem, size = 0x400, scoped, tag = 'output window, operand 0']
    %11 = vsyncpa [#allocation4], 0
    %s12 = scalar_lea.sflag [#allocation4], 1
    %13 = vsyncpa %s12, 0
    %14 = vsyncpa [#allocation7], 0
    %15 = vsyncpa [#allocation5], 0
    %s16 = scalar_lea.sflag [#allocation5], 1
    %17 = vsyncpa %s16, 0
    loop: start=0, step=1, limit=6
    $region2: #{tpu_custom_call.1} parent=1 // loop_pre_header
      _
    $region3: #{tpu_custom_call.1} parent=1 // loop_header
      %s19 = sphi 0, %s23
      %p20 = scmp.ge.s32.totalorder %s19, 6
      %s29 = sphi 0, %s31
      %s32 = sphi 0, %s29
      %s33 = sphi 0, %s32
      %s49 = sphi 0, %s33
      %s53 = sphi 0, %s53
      %s55 = sphi 0, %s53
      %s56 = sphi 0, %s55
      %s70 = sphi 0, %s56
      %s74 = sphi 0, %s74
      %s76 = sphi 0, %s74
      %s77 = sphi 0, %s76
      %s91 = sphi 0, %s77
      %s95 = sphi 0, %s95
      %s97 = sphi 0, %s95
      %s98 = sphi 0, %s97
      %s112 = sphi 0, %s98
      %s116 = sphi 0, %s116
      %s118 = sphi 0, %s116
      %s119 = sphi 0, %s118
      %s133 = sphi 0, %s119
      %s139 = sphi 0, %s141
      %s142 = sphi 0, %s139
      %s143 = sphi 0, %s142
      %s159 = sphi 0, %s143
    $region4: #{tpu_custom_call.1} parent=1 // loop_header_branch
      %22 = sbr.rel (%p20) target = $region8
    $region5: #{tpu_custom_call.1} parent=1 // loop_body
      %s24 = ssub.s32 %s19, 1
      %s25 = ssub.s32 %s19, 2
      %s26 = sadd.s32 %s19, 1
      %s27 = ssub.s32 %s19, %s26
      %p28 = scmp.eq.s32.totalorder %s27, 0
      %s30 = sadd.s32 %s29, 1
      %s31 = scalar_select %p28, %s29, %s30
      %p34 = pneg %p28
      %p35 = scmp.eq.s32.totalorder %s19, 3
      %p36 = por %p34, %p35
      %p37 = scmp.ne.s32.totalorder %s29, %s32
      %p38 = scmp.eq.s32.totalorder %s19, 0
      %p39 = por %p37, %p38
      %p40 = scmp.ne.s32.totalorder %s29, %s32
      %p41 = scmp.eq.s32.totalorder %s24, 3
      %p42 = por %p40, %p41
      %p43 = scmp.ne.s32.totalorder %s32, %s33
      %p44 = scmp.eq.s32.totalorder %s24, 0
      %p45 = por %p43, %p44
      %p46 = scmp.ne.s32.totalorder %s32, %s33
      %p47 = scmp.eq.s32.totalorder %s25, 3
      %p48 = por %p46, %p47
      %p50 = scmp.ne.s32.totalorder %s33, %s49
      %p51 = scmp.eq.s32.totalorder %s25, 0
      %p52 = por %p50, %p51
      %s54 = sadd.s32 %s53, 1
      %p57 = scmp.eq.s32.totalorder %s19, 3
      %p58 = scmp.ne.s32.totalorder %s53, %s55
      %p59 = scmp.eq.s32.totalorder %s19, 0
      %p60 = por %p58, %p59
      %p61 = scmp.ne.s32.totalorder %s53, %s55
      %p62 = scmp.eq.s32.totalorder %s24, 3
      %p63 = por %p61, %p62
      %p64 = scmp.ne.s32.totalorder %s55, %s56
      %p65 = scmp.eq.s32.totalorder %s24, 0
      %p66 = por %p64, %p65
      %p67 = scmp.ne.s32.totalorder %s55, %s56
      %p68 = scmp.eq.s32.totalorder %s25, 3
      %p69 = por %p67, %p68
      %p71 = scmp.ne.s32.totalorder %s56, %s70
      %p72 = scmp.eq.s32.totalorder %s25, 0
      %p73 = por %p71, %p72
      %s75 = sadd.s32 %s74, 1
      %p78 = scmp.eq.s32.totalorder %s19, 3
      %p79 = scmp.ne.s32.totalorder %s74, %s76
      %p80 = scmp.eq.s32.totalorder %s19, 0
      %p81 = por %p79, %p80
      %p82 = scmp.ne.s32.totalorder %s74, %s76
      %p83 = scmp.eq.s32.totalorder %s24, 3
      %p84 = por %p82, %p83
      %p85 = scmp.ne.s32.totalorder %s76, %s77
      %p86 = scmp.eq.s32.totalorder %s24, 0
      %p87 = por %p85, %p86
      %p88 = scmp.ne.s32.totalorder %s76, %s77
      %p89 = scmp.eq.s32.totalorder %s25, 3
      %p90 = por %p88, %p89
      %p92 = scmp.ne.s32.totalorder %s77, %s91
      %p93 = scmp.eq.s32.totalorder %s25, 0
      %p94 = por %p92, %p93
      %s96 = sadd.s32 %s95, 1
      %p99 = scmp.eq.s32.totalorder %s19, 3
      %p100 = scmp.ne.s32.totalorder %s95, %s97
      %p101 = scmp.eq.s32.totalorder %s19, 0
      %p102 = por %p100, %p101
      %p103 = scmp.ne.s32.totalorder %s95, %s97
      %p104 = scmp.eq.s32.totalorder %s24, 3
      %p105 = por %p103, %p104
      %p106 = scmp.ne.s32.totalorder %s97, %s98
      %p107 = scmp.eq.s32.totalorder %s24, 0
      %p108 = por %p106, %p107
      %p109 = scmp.ne.s32.totalorder %s97, %s98
      %p110 = scmp.eq.s32.totalorder %s25, 3
      %p111 = por %p109, %p110
      %p113 = scmp.ne.s32.totalorder %s98, %s112
      %p114 = scmp.eq.s32.totalorder %s25, 0
      %p115 = por %p113, %p114
      %s117 = sadd.s32 %s116, 1
      %p120 = scmp.eq.s32.totalorder %s19, 3
      %p121 = scmp.ne.s32.totalorder %s116, %s118
      %p122 = scmp.eq.s32.totalorder %s19, 0
      %p123 = por %p121, %p122
      %p124 = scmp.ne.s32.totalorder %s116, %s118
      %p125 = scmp.eq.s32.totalorder %s24, 3
      %p126 = por %p124, %p125
      %p127 = scmp.ne.s32.totalorder %s118, %s119
      %p128 = scmp.eq.s32.totalorder %s24, 0
      %p129 = por %p127, %p128
      %p130 = scmp.ne.s32.totalorder %s118, %s119
      %p131 = scmp.eq.s32.totalorder %s25, 3
      %p132 = por %p130, %p131
      %p134 = scmp.ne.s32.totalorder %s119, %s133
      %p135 = scmp.eq.s32.totalorder %s25, 0
      %p136 = por %p134, %p135
      %s137 = ssub.s32 %s19, %s26
      %p138 = scmp.eq.s32.totalorder %s137, 0
      %s140 = sadd.s32 %s139, 1
      %s141 = scalar_select %p138, %s139, %s140
      %p144 = pneg %p138
      %p145 = scmp.eq.s32.totalorder %s19, 3
      %p146 = por %p144, %p145
      %p147 = scmp.ne.s32.totalorder %s139, %s142
      %p148 = scmp.eq.s32.totalorder %s19, 0
      %p149 = por %p147, %p148
      %p150 = scmp.ne.s32.totalorder %s139, %s142
      %p151 = scmp.eq.s32.totalorder %s24, 3
      %p152 = por %p150, %p151
      %p153 = scmp.ne.s32.totalorder %s142, %s143
      %p154 = scmp.eq.s32.totalorder %s24, 0
      %p155 = por %p153, %p154
      %p156 = scmp.ne.s32.totalorder %s142, %s143
      %p157 = scmp.eq.s32.totalorder %s25, 3
      %p158 = por %p156, %p157
      %p160 = scmp.ne.s32.totalorder %s143, %s159
      %p161 = scmp.eq.s32.totalorder %s25, 0
      %p162 = por %p160, %p161
      %p163 = scmp.le.s32.totalorder 1, %s19
      %p164 = scmp.lt.s32.totalorder %s19, 5
      %p165 = pnand %p163, %p164
      %p166 = pneg %p165
      // Predicated region
      $region9: #{tpu_custom_call.1} parent=5 // pred_check
        _
      $region10: #{tpu_custom_call.1} parent=5 // pred_check_branch
        %168 = sbr.rel (%p165) target = $region12
      $region11: #{tpu_custom_call.1} parent=5 // pred_region
        %s169 = ssub.s32 %s19, 1
        // Predicated region
        $region13: #{tpu_custom_call.1} parent=11 // pred_check
          %p170 = pneg %p66
        $region14: #{tpu_custom_call.1} parent=11 // pred_check_branch
          %172 = sbr.rel (%p170) target = $region16
        $region15: #{tpu_custom_call.1} parent=11 // pred_region
          %s174 = ssub.s32 2048, 2048
          %175 = vsyncadd [#allocation7], %s174
          %s176 = sshll.u32 [#allocation6], 4
          %s177 = int_to_ptr.vmem [resolvable:$true] %s176
          %182 = dma.hbm_to_vmem [thread:$0]  %s1, 2048, %s177, [#allocation7], 128, 128, 8
        $region16: #{tpu_custom_call.1} parent=11 // pred_fallthru
          _
        // Predicated region
        $region17: #{tpu_custom_call.1} parent=11 // pred_check
          %p183 = pneg %p87
        $region18: #{tpu_custom_call.1} parent=11 // pred_check_branch
          %185 = sbr.rel (%p183) target = $region20
        $region19: #{tpu_custom_call.1} parent=11 // pred_region
          _
        $region20: #{tpu_custom_call.1} parent=11 // pred_fallthru
          _
        // Predicated region
        $region21: #{tpu_custom_call.1} parent=11 // pred_check
          %p186 = pneg %p108
        $region22: #{tpu_custom_call.1} parent=11 // pred_check_branch
          %188 = sbr.rel (%p186) target = $region24
        $region23: #{tpu_custom_call.1} parent=11 // pred_region
          _
        $region24: #{tpu_custom_call.1} parent=11 // pred_fallthru
          _
        // Predicated region
        $region25: #{tpu_custom_call.1} parent=11 // pred_check
          %p189 = pneg %p129
        $region26: #{tpu_custom_call.1} parent=11 // pred_check_branch
          %191 = sbr.rel (%p189) target = $region28
        $region27: #{tpu_custom_call.1} parent=11 // pred_region
          _
        $region28: #{tpu_custom_call.1} parent=11 // pred_fallthru
          _
      $region12: #{tpu_custom_call.1} parent=5 // pred_fallthru
        _
      %p192 = scmp.lt.s32.totalorder %s19, 4
      // Predicated region
      $region29: #{tpu_custom_call.1} parent=5 // pred_check
        %p193 = pneg %p192
      $region30: #{tpu_custom_call.1} parent=5 // pred_check_branch
        %195 = sbr.rel (%p193) target = $region32
      $region31: #{tpu_custom_call.1} parent=5 // pred_region
        // Predicated region
        $region33: #{tpu_custom_call.1} parent=31 // pred_check
          %p196 = pneg %p39
        $region34: #{tpu_custom_call.1} parent=31 // pred_check_branch
          %198 = sbr.rel (%p196) target = $region36
        $region35: #{tpu_custom_call.1} parent=31 // pred_region
          %s199 = sand.u32 %s29, 1
          %s200 = scalar_lea.sflag [#allocation4], %s199
          %s201 = sand.u32 %s29, 1
          %s202 = smul.addr %s201, 8
          %s203 = scalar_lea.vmem [#allocation3], %s202
          %s205 = ssub.s32 128, 128
          %206 = vsyncadd %s200, %s205
          %s207 = smul.addr %s19, 128
          %s208 = scalar_lea.hbm %s0, %s207
          %s210 = sshll.u32 %s203, 4
          %s211 = int_to_ptr.vmem [resolvable:$true] %s210
          %213 = dma.hbm_to_vmem [thread:$0]  %s208, 128, %s211, %s200
        $region36: #{tpu_custom_call.1} parent=31 // pred_fallthru
          _
      $region32: #{tpu_custom_call.1} parent=5 // pred_fallthru
        _
      %p214 = scmp.le.s32.totalorder 1, %s19
      %p215 = scmp.lt.s32.totalorder %s19, 5
      %p216 = pnand %p214, %p215
      %p217 = pneg %p216
      // Predicated region
      $region37: #{tpu_custom_call.1} parent=5 // pred_check
        _
      $region38: #{tpu_custom_call.1} parent=5 // pred_check_branch
        %219 = sbr.rel (%p216) target = $region40
      $region39: #{tpu_custom_call.1} parent=5 // pred_region
        %s220 = ssub.s32 %s19, 1
        %s221 = sand.u32 %s32, 1
        %s222 = scalar_lea.sflag [#allocation4], %s221
        %s223 = sand.u32 %s32, 1
        %s224 = smul.addr %s223, 8
        %s225 = scalar_lea.vmem [#allocation3], %s224
        // Predicated region
        $region41: #{tpu_custom_call.1} parent=39 // pred_check
          %p226 = pneg %p45
        $region42: #{tpu_custom_call.1} parent=39 // pred_check_branch
          %228 = sbr.rel (%p226) target = $region44
        $region43: #{tpu_custom_call.1} parent=39 // pred_region
          %229 = dma.done %s222, 128
        $region44: #{tpu_custom_call.1} parent=39 // pred_fallthru
          _
        // Predicated region
        $region45: #{tpu_custom_call.1} parent=39 // pred_check
          %p230 = pneg %p66
        $region46: #{tpu_custom_call.1} parent=39 // pred_check_branch
          %232 = sbr.rel (%p230) target = $region48
        $region47: #{tpu_custom_call.1} parent=39 // pred_region
          %233 = dma.done [#allocation7], 2048
        $region48: #{tpu_custom_call.1} parent=39 // pred_fallthru
          _
        %s234 = sand.u32 %s32, 1
        %s235 = scalar_lea.sflag [#allocation4], %s234
        %s236 = sand.u32 %s32, 1
        %s237 = smul.addr %s236, 8
        %s238 = scalar_lea.vmem [#allocation3], %s237
        %p239 = pneg %p45
        %p240 = pneg %p42
        %p241 = pneg %p66
        %p242 = pneg %p63
        %p243 = pneg %p87
        %p244 = pneg %p84
        %p245 = pneg %p108
        %p246 = pneg %p105
        %p247 = pneg %p129
        %p248 = pneg %p126
        %p249 = pneg %p155
        %p250 = pneg %p152
        %s251 = sand.u32 %s142, 1
        %s252 = scalar_lea.sflag [#allocation5], %s251
        %s253 = sand.u32 %s142, 1
        %s254 = scalar_lea.vmem [#allocation8], %s253
        %v255 = vld [vmem:[%s225] sm:$0xff]
        %v256 = vld [vmem:[#allocation6] sm:$0xff]
        %v257 = vld [vmem:[#allocation6 + $0x8] sm:$0xff]
        %v258 = vld [vmem:[#allocation6 + $0x10] sm:$0xff]
        %v259 = vld [vmem:[#allocation6 + $0x18] sm:$0xff]
        %v260 = vld [vmem:[#allocation6 + $0x20] sm:$0xff]
        %v261 = vld [vmem:[#allocation6 + $0x28] sm:$0xff]
        %v262 = vld [vmem:[#allocation6 + $0x30] sm:$0xff]
        %v263 = vld [vmem:[#allocation6 + $0x38] sm:$0xff]
        %v264 = vld [vmem:[#allocation6 + $0x40] sm:$0xff]
        %v265 = vld [vmem:[#allocation6 + $0x48] sm:$0xff]
        %v266 = vld [vmem:[#allocation6 + $0x50] sm:$0xff]
        %v267 = vld [vmem:[#allocation6 + $0x58] sm:$0xff]
        %v268 = vld [vmem:[#allocation6 + $0x60] sm:$0xff]
        %v269 = vld [vmem:[#allocation6 + $0x68] sm:$0xff]
        %v270 = vld [vmem:[#allocation6 + $0x70] sm:$0xff]
        %v271 = vld [vmem:[#allocation6 + $0x78] sm:$0xff]
        %v272 = vld [vmem:[%s2] sm:$0x1]
        %v274 = vlaneseq
        %v275 = vshrl.u32 %v274, 7
        %v276 = vsub.s32 0, %v275
        %v277 = vrot.slane %v272, %v276
        %279 = vmatprep.subr.mxu0 0.0
        %280 = vmatpush1.msra.mxu0 %v271
        %281 = vmatprep.subr.mxu0 0.0
        %282 = vmatpush1.msra.mxu0 %v270
        %283 = vmatprep.subr.mxu0 0.0
        %284 = vmatpush1.msra.mxu0 %v269
        %285 = vmatprep.subr.mxu0 0.0
        %286 = vmatpush1.msra.mxu0 %v268
        %287 = vmatprep.subr.mxu0 0.0
        %288 = vmatpush1.msra.mxu0 %v267
        %289 = vmatprep.subr.mxu0 0.0
        %290 = vmatpush1.msra.mxu0 %v266
        %291 = vmatprep.subr.mxu0 0.0
        %292 = vmatpush1.msra.mxu0 %v265
        %293 = vmatprep.subr.mxu0 0.0
        %294 = vmatpush1.msra.mxu0 %v264
        %295 = vmatprep.subr.mxu0 0.0
        %296 = vmatpush1.msra.mxu0 %v263
        %297 = vmatprep.subr.mxu0 0.0
        %298 = vmatpush1.msra.mxu0 %v262
        %299 = vmatprep.subr.mxu0 0.0
        %300 = vmatpush1.msra.mxu0 %v261
        %301 = vmatprep.subr.mxu0 0.0
        %302 = vmatpush1.msra.mxu0 %v260
        %303 = vmatprep.subr.mxu0 0.0
        %304 = vmatpush1.msra.mxu0 %v259
        %305 = vmatprep.subr.mxu0 0.0
        %306 = vmatpush1.msra.mxu0 %v258
        %307 = vmatprep.subr.mxu0 0.0
        %308 = vmatpush1.msra.mxu0 %v257
        %309 = vmatprep.subr.mxu0 0.0
        %310 = vmatpush1.msra.mxu0 %v256
        %311 = vmatprep.subr.mxu0 0.0
        %312 = vmatpush2.msra.mxu0 0.0
        %313 = vmatprep.subr.mxu0 0.0
        %314 = vmatpush2.msra.mxu0 0.0
        %315 = vmatprep.subr.mxu0 0.0
        %316 = vmatpush2.msra.mxu0 0.0
        %317 = vmatprep.subr.mxu0 0.0
        %318 = vmatpush2.msra.mxu0 0.0
        %319 = vmatprep.subr.mxu0 0.0
        %320 = vmatpush2.msra.mxu0 0.0
        %321 = vmatprep.subr.mxu0 0.0
        %322 = vmatpush2.msra.mxu0 0.0
        %323 = vmatprep.subr.mxu0 0.0
        %324 = vmatpush2.msra.mxu0 0.0
        %325 = vmatprep.subr.mxu0 0.0
        %326 = vmatpush2.msra.mxu0 0.0
        %327 = vmatprep.subr.mxu0 0.0
        %328 = vmatpush2.msra.mxu0 0.0
        %329 = vmatprep.subr.mxu0 0.0
        %330 = vmatpush2.msra.mxu0 0.0
        %331 = vmatprep.subr.mxu0 0.0
        %332 = vmatpush2.msra.mxu0 0.0
        %333 = vmatprep.subr.mxu0 0.0
        %334 = vmatpush2.msra.mxu0 0.0
        %335 = vmatprep.subr.mxu0 0.0
        %336 = vmatpush2.msra.mxu0 0.0
        %337 = vmatprep.subr.mxu0 0.0
        %338 = vmatpush2.msra.mxu0 0.0
        %339 = vmatprep.subr.mxu0 0.0
        %340 = vmatpush2.msra.mxu0 0.0
        %341 = vmatprep.subr.mxu0 0.0
        %342 = vmatpush2.msra.mxu0 0.0
        %343 = vmatprep.mubr.f32.mxu0 0.0
        %344 = vmatmul.mubr.f32.gmra.mxu0 %v255
        %v345 = vpop.f32.mrf.mxu0
        %v346 = vadd.f32 %v277, %v345
        %v347 = vpop.f32.mrf.mxu0
        %348 = vdwg.mxu0
        %v349 = vtanh.pop %v346
        %v350 = vld [vmem:[%s3] sm:$0x1]
        %v352 = vlaneseq
        %v353 = vshrl.u32 %v352, 7
        %v354 = vsub.s32 0, %v353
        %v355 = vrot.slane %v350, %v354
        %v357 = vmul.f32 %v349, %v355
        %358 = vadd.xlane.f32.xlu0 %v357
        %v359 = vpop.xlane.xlu0 %358
        %s360 = sld [smem:[#allocation2]]
        %v361 = vstv %s360
        %v362 = vadd.f32 %v359, %v361
        %v363 = vrot.slane %v362, 4
        %v364 = vmax.f32 %v362, %v363
        %v365 = vrot.slane %v364, 2
        %v366 = vmax.f32 %v364, %v365
        %v367 = vrot.slane %v366, 1
        %v368 = vmax.f32 %v366, %v367
        %v369 = vsub.f32 %v362, %v368
        %v370 = vmul.f32 %v369, 1.442695
        %v371 = vpow.pop %v370
        %v372 = vrot.slane %v371, 4
        %v373 = vadd.f32 %v371, %v372
        %v374 = vrot.slane %v373, 2
        %v375 = vadd.f32 %v373, %v374
        %v376 = vrot.slane %v375, 1
        %v377 = vadd.f32 %v375, %v376
        %v378 = vrcp.pop %v377
        %v379 = vmul.f32 %v371, %v378
        %380 = vxpose.xlu0.b32.start [1/16] %v379, 128
        %381 = vxpose.xlu0.b32.cont [2/16] 0.0, 128
        %382 = vxpose.xlu0.b32.cont [3/16] 0.0, 128
        %383 = vxpose.xlu0.b32.cont [4/16] 0.0, 128
        %384 = vxpose.xlu0.b32.cont [5/16] 0.0, 128
        %385 = vxpose.xlu0.b32.cont [6/16] 0.0, 128
        %386 = vxpose.xlu0.b32.cont [7/16] 0.0, 128
        %387 = vxpose.xlu0.b32.cont [8/16] 0.0, 128
        %388 = vxpose.xlu0.b32.cont [9/16] 0.0, 128
        %389 = vxpose.xlu0.b32.cont [10/16] 0.0, 128
        %390 = vxpose.xlu0.b32.cont [11/16] 0.0, 128
        %391 = vxpose.xlu0.b32.cont [12/16] 0.0, 128
        %392 = vxpose.xlu0.b32.cont [13/16] 0.0, 128
        %393 = vxpose.xlu0.b32.cont [14/16] 0.0, 128
        %394 = vxpose.xlu0.b32.cont [15/16] 0.0, 128
        %395 = vxpose.xlu0.b32.end [16/16] 0.0, 128
        %v396 = vpop.trf.xlu0
        %v397 = vpop.trf.xlu0
        %v398 = vpop.trf.xlu0
        %v399 = vpop.trf.xlu0
        %v400 = vpop.trf.xlu0
        %v401 = vpop.trf.xlu0
        %v402 = vpop.trf.xlu0
        %v403 = vpop.trf.xlu0
        %v404 = vpop.trf.xlu0
        %v405 = vpop.trf.xlu0
        %v406 = vpop.trf.xlu0
        %v407 = vpop.trf.xlu0
        %v408 = vpop.trf.xlu0
        %v409 = vpop.trf.xlu0
        %v410 = vpop.trf.xlu0
        %v411 = vpop.trf.xlu0
        %vm412 = vcmask 64512
        %v414 = vsel %vm412, %v396, 0
        %416 = vmatprep.subr.mxu0 0.0
        %417 = vmatpush1.msra.mxu0 0.0
        %418 = vmatprep.subr.mxu0 0.0
        %419 = vmatpush1.msra.mxu0 0.0
        %420 = vmatprep.subr.mxu0 0.0
        %421 = vmatpush1.msra.mxu0 0.0
        %422 = vmatprep.subr.mxu0 0.0
        %423 = vmatpush1.msra.mxu0 0.0
        %424 = vmatprep.subr.mxu0 0.0
        %425 = vmatpush1.msra.mxu0 0.0
        %426 = vmatprep.subr.mxu0 0.0
        %427 = vmatpush1.msra.mxu0 0.0
        %428 = vmatprep.subr.mxu0 0.0
        %429 = vmatpush1.msra.mxu0 0.0
        %430 = vmatprep.subr.mxu0 0.0
        %431 = vmatpush1.msra.mxu0 0.0
        %432 = vmatprep.subr.mxu0 0.0
        %433 = vmatpush1.msra.mxu0 0.0
        %434 = vmatprep.subr.mxu0 0.0
        %435 = vmatpush1.msra.mxu0 0.0
        %436 = vmatprep.subr.mxu0 0.0
        %437 = vmatpush1.msra.mxu0 0.0
        %438 = vmatprep.subr.mxu0 0.0
        %439 = vmatpush1.msra.mxu0 0.0
        %440 = vmatprep.subr.mxu0 0.0
        %441 = vmatpush1.msra.mxu0 0.0
        %442 = vmatprep.subr.mxu0 0.0
        %443 = vmatpush1.msra.mxu0 0.0
        %444 = vmatprep.subr.mxu0 0.0
        %445 = vmatpush1.msra.mxu0 0.0
        %446 = vmatprep.subr.mxu0 0.0
        %447 = vmatpush1.msra.mxu0 %v255
        %448 = vmatprep.subr.mxu0 0.0
        %449 = vmatpush2.msra.mxu0 0.0
        %450 = vmatprep.subr.mxu0 0.0
        %451 = vmatpush2.msra.mxu0 0.0
        %452 = vmatprep.subr.mxu0 0.0
        %453 = vmatpush2.msra.mxu0 0.0
        %454 = vmatprep.subr.mxu0 0.0
        %455 = vmatpush2.msra.mxu0 0.0
        %456 = vmatprep.subr.mxu0 0.0
        %457 = vmatpush2.msra.mxu0 0.0
        %458 = vmatprep.subr.mxu0 0.0
        %459 = vmatpush2.msra.mxu0 0.0
        %460 = vmatprep.subr.mxu0 0.0
        %461 = vmatpush2.msra.mxu0 0.0
        %462 = vmatprep.subr.mxu0 0.0
        %463 = vmatpush2.msra.mxu0 0.0
        %464 = vmatprep.subr.mxu0 0.0
        %465 = vmatpush2.msra.mxu0 0.0
        %466 = vmatprep.subr.mxu0 0.0
        %467 = vmatpush2.msra.mxu0 0.0
        %468 = vmatprep.subr.mxu0 0.0
        %469 = vmatpush2.msra.mxu0 0.0
        %470 = vmatprep.subr.mxu0 0.0
        %471 = vmatpush2.msra.mxu0 0.0
        %472 = vmatprep.subr.mxu0 0.0
        %473 = vmatpush2.msra.mxu0 0.0
        %474 = vmatprep.subr.mxu0 0.0
        %475 = vmatpush2.msra.mxu0 0.0
        %476 = vmatprep.subr.mxu0 0.0
        %477 = vmatpush2.msra.mxu0 0.0
        %478 = vmatprep.subr.mxu0 0.0
        %479 = vmatpush2.msra.mxu0 0.0
        %480 = vmatprep.mubr.f32.mxu0 0.0
        %481 = vmatmul.mubr.f32.gmra.mxu0 %v414
        %v482 = vpop.f32.mrf.mxu0
        %v483 = vadd.f32 0.0, %v482
        %v484 = vpop.f32.mrf.mxu0
        %485 = vdwg.mxu0
        %486 = vst [vmem:[%s254] sm:$0x1] %v483
        %s487 = sand.u32 %s142, 1
        %s488 = scalar_lea.sflag [#allocation5], %s487
        %s489 = sand.u32 %s142, 1
        %s490 = scalar_lea.vmem [#allocation8], %s489
        // Predicated region
        $region49: #{tpu_custom_call.1} parent=39 // pred_check
          %p491 = pneg %p152
        $region50: #{tpu_custom_call.1} parent=39 // pred_check_branch
          %493 = sbr.rel (%p491) target = $region52
        $region51: #{tpu_custom_call.1} parent=39 // pred_region
          %s495 = ssub.s32 16, 16
          %496 = vsyncadd %s488, %s495
          %s497 = smul.addr %s24, 16
          %s498 = scalar_lea.hbm %s5, %s497
          %s500 = sshll.u32 %s490, 4
          %s501 = int_to_ptr.vmem [resolvable:$true] %s500
          %503 = dma.vmem_to_hbm [thread:$0]  %s501, 16, %s498, %s488
        $region52: #{tpu_custom_call.1} parent=39 // pred_fallthru
          _
      $region40: #{tpu_custom_call.1} parent=5 // pred_fallthru
        _
      %p504 = scmp.le.s32.totalorder 2, %s19
      // Predicated region
      $region53: #{tpu_custom_call.1} parent=5 // pred_check
        %p505 = pneg %p504
      $region54: #{tpu_custom_call.1} parent=5 // pred_check_branch
        %507 = sbr.rel (%p505) target = $region56
      $region55: #{tpu_custom_call.1} parent=5 // pred_region
        %s508 = ssub.s32 %s19, 2
        // Predicated region
        $region57: #{tpu_custom_call.1} parent=55 // pred_check
          %p509 = pneg %p158
        $region58: #{tpu_custom_call.1} parent=55 // pred_check_branch
          %511 = sbr.rel (%p509) target = $region60
        $region59: #{tpu_custom_call.1} parent=55 // pred_region
          %s512 = sand.u32 %s143, 1
          %s513 = scalar_lea.sflag [#allocation5], %s512
          %s514 = sand.u32 %s143, 1
          %s515 = scalar_lea.vmem [#allocation8], %s514
          %516 = dma.done %s513, 16
        $region60: #{tpu_custom_call.1} parent=55 // pred_fallthru
          _
      $region56: #{tpu_custom_call.1} parent=5 // pred_fallthru
        _
    $region6: #{tpu_custom_call.1} parent=1 // loop_footer
      %s23 = sadd.s32 1, %s19
    $region7: #{tpu_custom_call.1} parent=1 // loop_footer_branch
      %18 = sbr.rel target = $region3
    $region8: #{tpu_custom_call.1} parent=1 // loop_exit
      _
    %517 = vsyncpa [#allocation4], 1
    %s518 = scalar_lea.sflag [#allocation4], 1
    %519 = vsyncpa %s518, 1
    %520 = vsyncpa [#allocation7], 1
    %521 = vsyncpa [#allocation5], 1
    %s522 = scalar_lea.sflag [#allocation5], 1
    %523 = vsyncpa %s522, 1

</llo_original>
